<compile_context>
chip_gen: v6e
topology: v6e:2x2x1
jax: 0.10.0
libtpu: 0.0.40
codegen_flags: <defaults>
</compile_context>

<pallas_src>
import math

import jax
import jax.numpy as jnp
import numpy as np
from jax.experimental import pallas as pl
from jax.experimental.pallas import tpu as pltpu


# ----------------------------------------------------------------------------
# Minimal "rs" helpers (structure only) mirroring e3nn's representation lists.
# Rs entries are (mul, l); parity is omitted (treated as 0 / "any").
# ----------------------------------------------------------------------------
def rs_simplify(Rs):
    out = []
    for mul, l in Rs:
        if out and out[-1][1] == l:
            out[-1] = (out[-1][0] + mul, l)
        else:
            out.append((mul, l))
    return out


def rs_dim(Rs):
    return sum(mul * (2 * l + 1) for mul, l in Rs)


def tensor_product_structure(Rs_1, Rs_2, lfilter):
    """Rs_ts of rs.tensor_product(Rs_1, Rs_2, selection_rule) (structure only)."""
    Rs_ts = []
    for mul1, l1 in Rs_1:
        for mul2, l2 in Rs_2:
            for l in range(abs(l1 - l2), l1 + l2 + 1):
                if lfilter(l):
                    Rs_ts.append((mul1 * mul2, l))
    return Rs_ts


def _round_up(x, m):
    return ((x + m - 1) // m) * m


# ----------------------------------------------------------------------------
# Pallas kernel:
#   xp[z, i*J + j] = x1[z, i] * x2[z, j]      (built via two MXU matmuls)
#   out[z, k]      = sum_{ij} xp[z, ij] * W2[ij, k]
# ----------------------------------------------------------------------------
def _tp_kernel(x1_ref, x2_ref, r_ref, s_ref, w_ref, o_ref):
    x1 = x1_ref[...].astype(jnp.float32)                       # [tz, I]
    x2 = x2_ref[...].astype(jnp.float32)                       # [tz, J]

    # MXU replication: dot(x1, R)[z, i*J+j] = x1[z, i],
    #                  dot(x2, S)[z, i*J+j] = x2[z, j].
    x1_rep = jnp.dot(x1, r_ref[...], preferred_element_type=jnp.float32)
    x2_rep = jnp.dot(x2, s_ref[...], preferred_element_type=jnp.float32)
    xp = x1_rep * x2_rep                                       # [tz, I*J] (VPU)

    acc = jnp.dot(xp, w_ref[...],                              # [I*J, K]
                  preferred_element_type=jnp.float32)          # f32 accumulation
    o_ref[...] = acc.astype(o_ref.dtype)


def tensor_product_pallas(features_1, features_2, w2_ijk, rep1, rep2,
                          dim_in1, dim_in2, *, tz=1024):
    """features_1: [..., I], features_2: [..., J], w2_ijk: [I*J, K],
    rep1: [I, I*J] 0/1 replication matrix, rep2: [J, I*J]."""
    IJ, K = w2_ijk.shape
    assert IJ == dim_in1 * dim_in2
    assert rep1.shape == (dim_in1, IJ) and rep2.shape == (dim_in2, IJ)
    *size, n1 = features_1.shape
    assert n1 == dim_in1
    *size2, n2 = features_2.shape
    assert tuple(size) == tuple(size2) and n2 == dim_in2

    Z = math.prod(size) if size else 1
    if Z == 0:
        return jnp.zeros((*size, K), dtype=features_1.dtype)

    x1 = features_1.reshape(Z, dim_in1)
    x2 = features_2.reshape(Z, dim_in2)

    # Batch tile: large to amortize the ~0.35 us/grid-step pipeline overhead,
    # multiple of 16 (legal sublane tiling for f32 and bf16 inputs), never
    # wildly over-padded for small Z, and capped at ceil(Z/2) rounded up so
    # the grid has >= 2 steps for Z > 16 (lets v7x shard the "parallel" batch
    # axis across both TensorCores).
    half = -(-Z // 2)
    tz_eff = min(tz, _round_up(half, 16))
    tz_eff = max(16, _round_up(tz_eff, 16))
    grid = pl.cdiv(Z, tz_eff)

    # TODO(synk): for real e3nn sizes where I*J*K pushes the fused kernel into
    # tens of MiB (v7x VMEM is 64 MiB physical / 32 MiB scoped default), add a
    # K (or I*J) reduction grid axis marked "arbitrary" with a VMEM f32
    # accumulator instead of keeping the whole weight resident.
    out = pl.pallas_call(
        _tp_kernel,
        out_shape=jax.ShapeDtypeStruct((Z, K), features_1.dtype),
        grid_spec=pltpu.PrefetchScalarGridSpec(
            num_scalar_prefetch=0,
            grid=(grid,),
            in_specs=[
                pl.BlockSpec((tz_eff, dim_in1), lambda z: (z, 0)),
                pl.BlockSpec((tz_eff, dim_in2), lambda z: (z, 0)),
                pl.BlockSpec((dim_in1, IJ), lambda z: (0, 0)),  # R, VMEM-resident
                pl.BlockSpec((dim_in2, IJ), lambda z: (0, 0)),  # S, VMEM-resident
                pl.BlockSpec((IJ, K), lambda z: (0, 0)),        # W2, VMEM-resident
            ],
            out_specs=pl.BlockSpec((tz_eff, K), lambda z: (z, 0)),
        ),
        compiler_params=pltpu.CompilerParams(
            dimension_semantics=("parallel",)),
    )(x1, x2, rep1, rep2, w2_ijk)

    return out.reshape(*size, K)


# ----------------------------------------------------------------------------
# Module-equivalent setup + forward (parameters built deterministically)
# ----------------------------------------------------------------------------
class LearnableTensorProductPallas:
    def __init__(self, Rs_in1, Rs_in2, Rs_out, key):
        self.Rs_in1 = rs_simplify(Rs_in1)
        self.Rs_in2 = rs_simplify(Rs_in2)
        self.Rs_out = rs_simplify(Rs_out)

        ls_out = [l for _, l in self.Rs_out]
        Rs_ts = tensor_product_structure(
            self.Rs_in1, self.Rs_in2, lfilter=lambda l: l in ls_out)
        ls_ts = [l for _, l in Rs_ts]
        assert all(l in ls_ts for _, l in self.Rs_out)

        self.dim_in1 = rs_dim(self.Rs_in1)
        self.dim_in2 = rs_dim(self.Rs_in2)
        self.dim_out = rs_dim(self.Rs_out)
        self.dim_ts = rs_dim(Rs_ts)

        k_T, k_W = jax.random.split(key)
        # TODO(synk): T should hold Wigner-3j (Clebsch-Gordan) coefficients and
        # the KernelLinear weight should be l-block structured; here both are
        # shape-correct deterministic random dense matrices (synthetic params).
        self.T = jax.random.normal(
            k_T, (self.dim_ts, self.dim_in1 * self.dim_in2), jnp.float32)
        self.W = jax.random.normal(
            k_W, (self.dim_out, self.dim_ts), jnp.float32) / np.sqrt(self.dim_ts)

        # Hoisted fused-kernel construction (done once, not per call):
        # (T.t() @ W.T).T == W @ T -> [K, I*J] -> [K, I, J] -> [I*J, K]
        self.kernel_kij = (self.W @ self.T).reshape(
            self.dim_out, self.dim_in1, self.dim_in2)          # [K, I, J]
        self.W2 = jnp.transpose(self.kernel_kij, (1, 2, 0)).reshape(
            self.dim_in1 * self.dim_in2, self.dim_out)          # [I*J, K]
        self.W2 = jax.block_until_ready(self.W2)

        # 0/1 replication matrices for MXU-based outer-product build:
        #   R[i, i*J + j] = 1   -> dot(x1, R)[z, i*J+j] = x1[z, i]
        #   S[j, i*J + j] = 1   -> dot(x2, S)[z, i*J+j] = x2[z, j]
        I, J = self.dim_in1, self.dim_in2
        self.R = jnp.asarray(
            np.repeat(np.eye(I, dtype=np.float32), J, axis=1))  # [I, I*J]
        self.S = jnp.asarray(
            np.tile(np.eye(J, dtype=np.float32), (1, I)))       # [J, I*J]

    def __call__(self, features_1, features_2, *, tz=1024):
        assert features_1.shape[-1] == self.dim_in1
        assert features_2.shape[-1] == self.dim_in2
        assert features_1.shape[:-1] == features_2.shape[:-1]
        return tensor_product_pallas(
            features_1, features_2, self.W2, self.R, self.S,
            self.dim_in1, self.dim_in2, tz=tz)


if __name__ == "__main__":
    key = jax.random.PRNGKey(0)
    k_mod, k1, k2 = jax.random.split(key, 3)

    # Rs_in1: 4x l=0 + 2x l=1 -> dim 10 ; Rs_in2: 2x l=0 + 2x l=1 -> dim 8
    # Rs_out: 4x l=0 + 4x l=1 -> dim 16
    Rs_in1 = [(4, 0), (2, 1)]
    Rs_in2 = [(2, 0), (2, 1)]
    Rs_out = [(4, 0), (4, 1)]
    mod = LearnableTensorProductPallas(Rs_in1, Rs_in2, Rs_out, k_mod)

    batch, seq = 2, 16                          # leading dims -> Z = 32
    f1 = jax.random.normal(k1, (batch, seq, mod.dim_in1), jnp.float32)
    f2 = jax.random.normal(k2, (batch, seq, mod.dim_in2), jnp.float32)

    out = jax.block_until_ready(mod(f1, f2))

    # reference (plain JAX) check of the einsum hot path
    ref = jnp.einsum('kij,zi,zj->zk', mod.kernel_kij,
                     f1.reshape(-1, mod.dim_in1),
                     f2.reshape(-1, mod.dim_in2)).reshape(batch, seq, mod.dim_out)
    np.testing.assert_allclose(np.asarray(out), np.asarray(ref),
                               rtol=1e-3, atol=1e-3)

    # Non-tile-divisible flattened batch (Z = 21) exercises the ragged last
    # grid block (no wrapper-side pad/slice HBM copies anymore).
    k3, k4 = jax.random.split(k1)
    g1 = jax.random.normal(k3, (3, 7, mod.dim_in1), jnp.float32)
    g2 = jax.random.normal(k4, (3, 7, mod.dim_in2), jnp.float32)
    out2 = jax.block_until_ready(mod(g1, g2))
    ref2 = jnp.einsum('kij,zi,zj->zk', mod.kernel_kij,
                      g1.reshape(-1, mod.dim_in1),
                      g2.reshape(-1, mod.dim_in2)).reshape(3, 7, mod.dim_out)
    np.testing.assert_allclose(np.asarray(out2), np.asarray(ref2),
                               rtol=1e-3, atol=1e-3)

    # Empty leading dims (Z = 0) guard.
    h1 = jnp.zeros((0, 5, mod.dim_in1), jnp.float32)
    h2 = jnp.zeros((0, 5, mod.dim_in2), jnp.float32)
    out3 = jax.block_until_ready(mod(h1, h2))
    assert out3.shape == (0, 5, mod.dim_out)

    print("KERNEL_OK")
</pallas_src>

<mosaic_0001>
module attributes {stable_mosaic.version = 11 : i64} {
  func.func @_tp_kernel(%arg0: i32, %arg1: memref<16x10xf32, #tpu.memory_space<vmem>>, %arg2: memref<16x8xf32, #tpu.memory_space<vmem>>, %arg3: memref<10x80xf32, #tpu.memory_space<vmem>>, %arg4: memref<8x80xf32, #tpu.memory_space<vmem>>, %arg5: memref<80x16xf32, #tpu.memory_space<vmem>>, %arg6: memref<16x16xf32, #tpu.memory_space<vmem>>) attributes {dimension_semantics = [#tpu.dimension_semantics<parallel>], iteration_bounds = array<i64: 2>, scalar_prefetch = 0 : i64, scratch_operands = 0 : i64, tpu.core_type = #tpu.core_type<tc>, window_params = [{transform_indices = @transform_0, window_bounds = array<i64: 16, 10>}, {transform_indices = @transform_1, window_bounds = array<i64: 16, 8>}, {pipeline_mode = #tpu.pipeline_mode<synchronous>, transform_indices = @transform_2, window_bounds = array<i64: 10, 80>}, {pipeline_mode = #tpu.pipeline_mode<synchronous>, transform_indices = @transform_3, window_bounds = array<i64: 8, 80>}, {pipeline_mode = #tpu.pipeline_mode<synchronous>, transform_indices = @transform_4, window_bounds = array<i64: 80, 16>}, {transform_indices = @transform_5, window_bounds = array<i64: 16, 16>}]} {
    %c0 = arith.constant 0 : index
    %c0_0 = arith.constant 0 : index
    %0 = vector.load %arg1[%c0, %c0_0] : memref<16x10xf32, #tpu.memory_space<vmem>>, vector<16x10xf32>
    %c0_1 = arith.constant 0 : index
    %c0_2 = arith.constant 0 : index
    %1 = vector.load %arg2[%c0_1, %c0_2] : memref<16x8xf32, #tpu.memory_space<vmem>>, vector<16x8xf32>
    %c0_3 = arith.constant 0 : index
    %c0_4 = arith.constant 0 : index
    %2 = vector.load %arg3[%c0_3, %c0_4] : memref<10x80xf32, #tpu.memory_space<vmem>>, vector<10x80xf32>
    %cst = arith.constant dense<0.000000e+00> : vector<16x80xf32>
    %3 = tpu.matmul %0, %2, %cst {dimension_numbers = #tpu.dot_dimension_numbers<[1], [0], [0], [1], [0, 0, 1, 1], [], []>} : vector<16x10xf32>, vector<10x80xf32>, vector<16x80xf32> -> vector<16x80xf32>
    %c0_5 = arith.constant 0 : index
    %c0_6 = arith.constant 0 : index
    %4 = vector.load %arg4[%c0_5, %c0_6] : memref<8x80xf32, #tpu.memory_space<vmem>>, vector<8x80xf32>
    %cst_7 = arith.constant dense<0.000000e+00> : vector<16x80xf32>
    %5 = tpu.matmul %1, %4, %cst_7 {dimension_numbers = #tpu.dot_dimension_numbers<[1], [0], [0], [1], [0, 0, 1, 1], [], []>} : vector<16x8xf32>, vector<8x80xf32>, vector<16x80xf32> -> vector<16x80xf32>
    %6 = arith.mulf %3, %5 : vector<16x80xf32>
    %c0_8 = arith.constant 0 : index
    %c0_9 = arith.constant 0 : index
    %7 = vector.load %arg5[%c0_8, %c0_9] : memref<80x16xf32, #tpu.memory_space<vmem>>, vector<80x16xf32>
    %cst_10 = arith.constant dense<0.000000e+00> : vector<16x16xf32>
    %8 = tpu.matmul %6, %7, %cst_10 {dimension_numbers = #tpu.dot_dimension_numbers<[1], [0], [0], [1], [0, 0, 1, 1], [], []>} : vector<16x80xf32>, vector<80x16xf32>, vector<16x16xf32> -> vector<16x16xf32>
    %c0_11 = arith.constant 0 : index
    %c0_12 = arith.constant 0 : index
    %9 = vector.load %arg6[%c0_11, %c0_12] : memref<16x16xf32, #tpu.memory_space<vmem>>, vector<16x16xf32>
    tpu.vector_store %arg6[%c0_11, %c0_12], %8 {strides = array<i32>} : memref<16x16xf32, #tpu.memory_space<vmem>>, vector<16x16xf32>,
    return
  }
  func.func @transform_0(%arg0: i32) -> (i32, i32) {
    %c0_i32 = arith.constant 0 : i32
    %c0_i32_0 = arith.constant 0 : i32
    return %arg0, %c0_i32 : i32, i32
  }
  func.func @transform_1(%arg0: i32) -> (i32, i32) {
    %c0_i32 = arith.constant 0 : i32
    %c0_i32_0 = arith.constant 0 : i32
    return %arg0, %c0_i32 : i32, i32
  }
  func.func @transform_2(%arg0: i32) -> (i32, i32) {
    %c0_i32 = arith.constant 0 : i32
    %c0_i32_0 = arith.constant 0 : i32
    %c0_i32_1 = arith.constant 0 : i32
    return %c0_i32, %c0_i32_0 : i32, i32
  }
  func.func @transform_3(%arg0: i32) -> (i32, i32) {
    %c0_i32 = arith.constant 0 : i32
    %c0_i32_0 = arith.constant 0 : i32
    %c0_i32_1 = arith.constant 0 : i32
    return %c0_i32, %c0_i32_0 : i32, i32
  }
  func.func @transform_4(%arg0: i32) -> (i32, i32) {
    %c0_i32 = arith.constant 0 : i32
    %c0_i32_0 = arith.constant 0 : i32
    %c0_i32_1 = arith.constant 0 : i32
    return %c0_i32, %c0_i32_0 : i32, i32
  }
  func.func @transform_5(%arg0: i32) -> (i32, i32) {
    %c0_i32 = arith.constant 0 : i32
    %c0_i32_0 = arith.constant 0 : i32
    return %arg0, %c0_i32 : i32, i32
  }
}

</mosaic_0001>

<llo_original>
// kernel: tpu_custom_call.1
$region0: #{tpu_custom_call.1}
  #allocation0 [shape = 'u32[]', space=smem, size = 0x4, offset = 0x4, fixed_abs, tag = 'smem constant byte address 0x4 - core index']
  #allocation1 [shape = 'u32[144,128]{1,0:T(1,128)}', space=vmem, size = 0x12000, scoped, tag = 'internal scratch']
  %s0 = inlined_call_operand.vmem [shape: f32[32,10], index: 0, kind: input, shape index: {}]
  %s1 = inlined_call_operand.vmem [shape: f32[32,8], index: 1, kind: input, shape index: {}]
  %s2 = inlined_call_operand.vmem [shape: f32[10,80], index: 2, kind: input, shape index: {}]
  %s3 = inlined_call_operand.vmem [shape: f32[8,80], index: 3, kind: input, shape index: {}]
  %s4 = inlined_call_operand.vmem [shape: f32[80,16], index: 4, kind: input, shape index: {}]
  %s5 = inlined_call_operand.vmem [shape: f32[32,16], index: 5, kind: output, shape index: {}]
  %s6 = sld [smem:[#allocation0]]
  $region53: #{tpu_custom_call.1} parent=0
    _
  %s8 = ssub.s32 1, %s6
  %s9 = scalar_select 0, %s8, %s6
  loop: start=0, step=1, limit=4
  $region2: #{tpu_custom_call.1} parent=0 // loop_pre_header
    _
  $region3: #{tpu_custom_call.1} parent=0 // loop_header
    %s11 = sphi 0, %s15
    %p12 = scmp.ge.s32.totalorder %s11, 4
    %s21 = sphi 0, %s23
    %s24 = sphi 0, %s21
    %s25 = sphi 0, %s24
    %s41 = sphi 0, %s25
    %s47 = sphi 0, %s49
    %s50 = sphi 0, %s47
    %s51 = sphi 0, %s50
    %s67 = sphi 0, %s51
    %s71 = sphi 0, %s71
    %s73 = sphi 0, %s71
    %s74 = sphi 0, %s73
    %s88 = sphi 0, %s74
    %s92 = sphi 0, %s92
    %s94 = sphi 0, %s92
    %s95 = sphi 0, %s94
    %s109 = sphi 0, %s95
    %s113 = sphi 0, %s113
    %s115 = sphi 0, %s113
    %s116 = sphi 0, %s115
    %s130 = sphi 0, %s116
    %s136 = sphi 0, %s138
    %s139 = sphi 0, %s136
    %s140 = sphi 0, %s139
    %s156 = sphi 0, %s140
  $region4: #{tpu_custom_call.1} parent=0 // loop_header_branch
    %14 = sbr.rel (%p12) target = $region8
  $region5: #{tpu_custom_call.1} parent=0 // loop_body
    %s16 = ssub.s32 %s11, 1
    %s17 = ssub.s32 %s11, 2
    %s18 = sadd.s32 %s11, 1
    %s19 = ssub.s32 %s11, %s18
    %p20 = scmp.eq.s32.totalorder %s19, 0
    %s22 = sadd.s32 %s21, 1
    %s23 = scalar_select %p20, %s21, %s22
    %p26 = pneg %p20
    %p27 = scmp.eq.s32.totalorder %s11, 1
    %p28 = por %p26, %p27
    %p29 = scmp.ne.s32.totalorder %s21, %s24
    %p30 = scmp.eq.s32.totalorder %s11, 0
    %p31 = por %p29, %p30
    %p32 = scmp.ne.s32.totalorder %s21, %s24
    %p33 = scmp.eq.s32.totalorder %s16, 1
    %p34 = por %p32, %p33
    %p35 = scmp.ne.s32.totalorder %s24, %s25
    %p36 = scmp.eq.s32.totalorder %s16, 0
    %p37 = por %p35, %p36
    %p38 = scmp.ne.s32.totalorder %s24, %s25
    %p39 = scmp.eq.s32.totalorder %s17, 1
    %p40 = por %p38, %p39
    %p42 = scmp.ne.s32.totalorder %s25, %s41
    %p43 = scmp.eq.s32.totalorder %s17, 0
    %p44 = por %p42, %p43
    %s45 = ssub.s32 %s11, %s18
    %p46 = scmp.eq.s32.totalorder %s45, 0
    %s48 = sadd.s32 %s47, 1
    %s49 = scalar_select %p46, %s47, %s48
    %p52 = pneg %p46
    %p53 = scmp.eq.s32.totalorder %s11, 1
    %p54 = por %p52, %p53
    %p55 = scmp.ne.s32.totalorder %s47, %s50
    %p56 = scmp.eq.s32.totalorder %s11, 0
    %p57 = por %p55, %p56
    %p58 = scmp.ne.s32.totalorder %s47, %s50
    %p59 = scmp.eq.s32.totalorder %s16, 1
    %p60 = por %p58, %p59
    %p61 = scmp.ne.s32.totalorder %s50, %s51
    %p62 = scmp.eq.s32.totalorder %s16, 0
    %p63 = por %p61, %p62
    %p64 = scmp.ne.s32.totalorder %s50, %s51
    %p65 = scmp.eq.s32.totalorder %s17, 1
    %p66 = por %p64, %p65
    %p68 = scmp.ne.s32.totalorder %s51, %s67
    %p69 = scmp.eq.s32.totalorder %s17, 0
    %p70 = por %p68, %p69
    %s72 = sadd.s32 %s71, 1
    %p75 = scmp.eq.s32.totalorder %s11, 1
    %p76 = scmp.ne.s32.totalorder %s71, %s73
    %p77 = scmp.eq.s32.totalorder %s11, 0
    %p78 = por %p76, %p77
    %p79 = scmp.ne.s32.totalorder %s71, %s73
    %p80 = scmp.eq.s32.totalorder %s16, 1
    %p81 = por %p79, %p80
    %p82 = scmp.ne.s32.totalorder %s73, %s74
    %p83 = scmp.eq.s32.totalorder %s16, 0
    %p84 = por %p82, %p83
    %p85 = scmp.ne.s32.totalorder %s73, %s74
    %p86 = scmp.eq.s32.totalorder %s17, 1
    %p87 = por %p85, %p86
    %p89 = scmp.ne.s32.totalorder %s74, %s88
    %p90 = scmp.eq.s32.totalorder %s17, 0
    %p91 = por %p89, %p90
    %s93 = sadd.s32 %s92, 1
    %p96 = scmp.eq.s32.totalorder %s11, 1
    %p97 = scmp.ne.s32.totalorder %s92, %s94
    %p98 = scmp.eq.s32.totalorder %s11, 0
    %p99 = por %p97, %p98
    %p100 = scmp.ne.s32.totalorder %s92, %s94
    %p101 = scmp.eq.s32.totalorder %s16, 1
    %p102 = por %p100, %p101
    %p103 = scmp.ne.s32.totalorder %s94, %s95
    %p104 = scmp.eq.s32.totalorder %s16, 0
    %p105 = por %p103, %p104
    %p106 = scmp.ne.s32.totalorder %s94, %s95
    %p107 = scmp.eq.s32.totalorder %s17, 1
    %p108 = por %p106, %p107
    %p110 = scmp.ne.s32.totalorder %s95, %s109
    %p111 = scmp.eq.s32.totalorder %s17, 0
    %p112 = por %p110, %p111
    %s114 = sadd.s32 %s113, 1
    %p117 = scmp.eq.s32.totalorder %s11, 1
    %p118 = scmp.ne.s32.totalorder %s113, %s115
    %p119 = scmp.eq.s32.totalorder %s11, 0
    %p120 = por %p118, %p119
    %p121 = scmp.ne.s32.totalorder %s113, %s115
    %p122 = scmp.eq.s32.totalorder %s16, 1
    %p123 = por %p121, %p122
    %p124 = scmp.ne.s32.totalorder %s115, %s116
    %p125 = scmp.eq.s32.totalorder %s16, 0
    %p126 = por %p124, %p125
    %p127 = scmp.ne.s32.totalorder %s115, %s116
    %p128 = scmp.eq.s32.totalorder %s17, 1
    %p129 = por %p127, %p128
    %p131 = scmp.ne.s32.totalorder %s116, %s130
    %p132 = scmp.eq.s32.totalorder %s17, 0
    %p133 = por %p131, %p132
    %s134 = ssub.s32 %s11, %s18
    %p135 = scmp.eq.s32.totalorder %s134, 0
    %s137 = sadd.s32 %s136, 1
    %s138 = scalar_select %p135, %s136, %s137
    %p141 = pneg %p135
    %p142 = scmp.eq.s32.totalorder %s11, 1
    %p143 = por %p141, %p142
    %p144 = scmp.ne.s32.totalorder %s136, %s139
    %p145 = scmp.eq.s32.totalorder %s11, 0
    %p146 = por %p144, %p145
    %p147 = scmp.ne.s32.totalorder %s136, %s139
    %p148 = scmp.eq.s32.totalorder %s16, 1
    %p149 = por %p147, %p148
    %p150 = scmp.ne.s32.totalorder %s139, %s140
    %p151 = scmp.eq.s32.totalorder %s16, 0
    %p152 = por %p150, %p151
    %p153 = scmp.ne.s32.totalorder %s139, %s140
    %p154 = scmp.eq.s32.totalorder %s17, 1
    %p155 = por %p153, %p154
    %p157 = scmp.ne.s32.totalorder %s140, %s156
    %p158 = scmp.eq.s32.totalorder %s17, 0
    %p159 = por %p157, %p158
    %p160 = scmp.le.s32.totalorder 1, %s11
    %p161 = scmp.lt.s32.totalorder %s11, 3
    %p162 = pnand %p160, %p161
    %p163 = pneg %p162
    // Predicated region
    $region9: #{tpu_custom_call.1} parent=5 // pred_check
      _
    $region10: #{tpu_custom_call.1} parent=5 // pred_check_branch
      %165 = sbr.rel (%p162) target = $region12
    $region11: #{tpu_custom_call.1} parent=5 // pred_region
      %s166 = ssub.s32 %s11, 1
      // Predicated region
      $region13: #{tpu_custom_call.1} parent=11 // pred_check
        %p167 = pneg %p84
      $region14: #{tpu_custom_call.1} parent=11 // pred_check_branch
        %169 = sbr.rel (%p167) target = $region16
      $region15: #{tpu_custom_call.1} parent=11 // pred_region
        _
      $region16: #{tpu_custom_call.1} parent=11 // pred_fallthru
        _
      // Predicated region
      $region17: #{tpu_custom_call.1} parent=11 // pred_check
        %p170 = pneg %p105
      $region18: #{tpu_custom_call.1} parent=11 // pred_check_branch
        %172 = sbr.rel (%p170) target = $region20
      $region19: #{tpu_custom_call.1} parent=11 // pred_region
        _
      $region20: #{tpu_custom_call.1} parent=11 // pred_fallthru
        _
      // Predicated region
      $region21: #{tpu_custom_call.1} parent=11 // pred_check
        %p173 = pneg %p126
      $region22: #{tpu_custom_call.1} parent=11 // pred_check_branch
        %175 = sbr.rel (%p173) target = $region24
      $region23: #{tpu_custom_call.1} parent=11 // pred_region
        _
      $region24: #{tpu_custom_call.1} parent=11 // pred_fallthru
        _
    $region12: #{tpu_custom_call.1} parent=5 // pred_fallthru
      _
    %p176 = scmp.lt.s32.totalorder %s11, 2
    // Predicated region
    $region25: #{tpu_custom_call.1} parent=5 // pred_check
      %p177 = pneg %p176
    $region26: #{tpu_custom_call.1} parent=5 // pred_check_branch
      %179 = sbr.rel (%p177) target = $region28
    $region27: #{tpu_custom_call.1} parent=5 // pred_region
      // Predicated region
      $region29: #{tpu_custom_call.1} parent=27 // pred_check
        %p180 = pneg %p31
      $region30: #{tpu_custom_call.1} parent=27 // pred_check_branch
        %182 = sbr.rel (%p180) target = $region32
      $region31: #{tpu_custom_call.1} parent=27 // pred_region
        %s183 = smul.u32 2, %s11
        %p184 = scmp.lt.s32.totalorder %s183, 3
        %s185 = scalar_select %p184, %s183, 3
        %s186 = smul.addr %s185, 8
        %s187 = scalar_lea.vmem %s0, %s186
        %s188 = smul.u32 2, %s11
      $region32: #{tpu_custom_call.1} parent=27 // pred_fallthru
        _
      // Predicated region
      $region33: #{tpu_custom_call.1} parent=27 // pred_check
        %p189 = pneg %p57
      $region34: #{tpu_custom_call.1} parent=27 // pred_check_branch
        %191 = sbr.rel (%p189) target = $region36
      $region35: #{tpu_custom_call.1} parent=27 // pred_region
        %s192 = smul.u32 2, %s11
        %p193 = scmp.lt.s32.totalorder %s192, 3
        %s194 = scalar_select %p193, %s192, 3
        %s195 = smul.addr %s194, 8
        %s196 = scalar_lea.vmem %s1, %s195
        %s197 = smul.u32 2, %s11
      $region36: #{tpu_custom_call.1} parent=27 // pred_fallthru
        _
    $region28: #{tpu_custom_call.1} parent=5 // pred_fallthru
      _
    %p198 = scmp.le.s32.totalorder 1, %s11
    %p199 = scmp.lt.s32.totalorder %s11, 3
    %p200 = pnand %p198, %p199
    %p201 = pneg %p200
    // Predicated region
    $region37: #{tpu_custom_call.1} parent=5 // pred_check
      _
    $region38: #{tpu_custom_call.1} parent=5 // pred_check_branch
      %203 = sbr.rel (%p200) target = $region40
    $region39: #{tpu_custom_call.1} parent=5 // pred_region
      %s204 = ssub.s32 %s11, 1
      %s205 = smul.u32 2, %s16
      %p206 = scmp.lt.s32.totalorder %s205, 3
      %s207 = scalar_select %p206, %s205, 3
      %s208 = smul.addr %s207, 8
      %s209 = scalar_lea.vmem %s0, %s208
      %p210 = pneg %p37
      %p211 = pneg %p34
      %s212 = smul.u32 2, %s16
      %p213 = scmp.lt.s32.totalorder %s212, 3
      %s214 = scalar_select %p213, %s212, 3
      %s215 = smul.addr %s214, 8
      %s216 = scalar_lea.vmem %s1, %s215
      %p217 = pneg %p63
      %p218 = pneg %p60
      %p219 = pneg %p84
      %p220 = pneg %p81
      %p221 = pneg %p105
      %p222 = pneg %p102
      %p223 = pneg %p126
      %p224 = pneg %p123
      %p225 = pneg %p152
      %p226 = pneg %p149
      %s227 = smul.u32 2, %s16
      %p228 = scmp.lt.s32.totalorder %s227, 3
      %s229 = scalar_select %p228, %s227, 3
      %s230 = smul.addr %s229, 8
      %s231 = scalar_lea.vmem %s5, %s230
      %s232 = smul.u32 2, %s16
      %p233 = scmp.lt.s32.totalorder %s232, 3
      %s234 = scalar_select %p233, %s232, 3
      %s235 = smul.addr %s234, 8
      %s236 = scalar_lea.vmem %s0, %s235
      %s237 = smul.u32 2, %s16
      %s238 = smul.u32 2, %s16
      %p239 = scmp.lt.s32.totalorder %s238, 3
      %s240 = scalar_select %p239, %s238, 3
      %s241 = smul.addr %s240, 8
      %s242 = scalar_lea.vmem %s1, %s241
      %s243 = smul.u32 2, %s16
      %s244 = smul.u32 2, %s16
      %p245 = scmp.lt.s32.totalorder %s244, 3
      %s246 = scalar_select %p245, %s244, 3
      %s247 = smul.addr %s246, 8
      %s248 = scalar_lea.vmem %s5, %s247
      %s249 = smul.u32 2, %s16
      %v250 = vld [vmem:[%s236] sm:$0xff]
      %v251 = vld [vmem:[%s236 + $0x8] sm:$0xff]
      %v252 = vld [vmem:[%s242] sm:$0xff]
      %v253 = vld [vmem:[%s242 + $0x8] sm:$0xff]
      %v254 = vld [vmem:[%s2] sm:$0xff]
      %v255 = vld [vmem:[%s2 + $0x8] sm:$0x3]
      %vm256 = vcmask 80896
      %v258 = vsel %vm256, %v250, 0
      %v261 = vsel %vm256, %v251, 0
      %vm263 = vcmask 1041408
      %v265 = vsel %vm263, %v255, 0
      %267 = vmatprep.subr.mxu0 0.0
      %268 = vmatpush1.msra.mxu0 0.0
      %269 = vmatprep.subr.mxu0 0.0
      %270 = vmatpush1.msra.mxu0 0.0
      %271 = vmatprep.subr.mxu0 0.0
      %272 = vmatpush1.msra.mxu0 0.0
      %273 = vmatprep.subr.mxu0 0.0
      %274 = vmatpush1.msra.mxu0 0.0
      %275 = vmatprep.subr.mxu0 0.0
      %276 = vmatpush1.msra.mxu0 0.0
      %277 = vmatprep.subr.mxu0 0.0
      %278 = vmatpush1.msra.mxu0 0.0
      %279 = vmatprep.subr.mxu0 0.0
      %280 = vmatpush1.msra.mxu0 0.0
      %281 = vmatprep.subr.mxu0 0.0
      %282 = vmatpush1.msra.mxu0 0.0
      %283 = vmatprep.subr.mxu0 0.0
      %284 = vmatpush1.msra.mxu0 0.0
      %285 = vmatprep.subr.mxu0 0.0
      %286 = vmatpush1.msra.mxu0 0.0
      %287 = vmatprep.subr.mxu0 0.0
      %288 = vmatpush1.msra.mxu0 0.0
      %289 = vmatprep.subr.mxu0 0.0
      %290 = vmatpush1.msra.mxu0 0.0
      %291 = vmatprep.subr.mxu0 0.0
      %292 = vmatpush1.msra.mxu0 0.0
      %293 = vmatprep.subr.mxu0 0.0
      %294 = vmatpush1.msra.mxu0 0.0
      %295 = vmatprep.subr.mxu0 0.0
      %296 = vmatpush1.msra.mxu0 %v265
      %297 = vmatprep.subr.mxu0 0.0
      %298 = vmatpush1.msra.mxu0 %v254
      %299 = vmatprep.subr.mxu0 0.0
      %300 = vmatpush2.msra.mxu0 0.0
      %301 = vmatprep.subr.mxu0 0.0
      %302 = vmatpush2.msra.mxu0 0.0
      %303 = vmatprep.subr.mxu0 0.0
      %304 = vmatpush2.msra.mxu0 0.0
      %305 = vmatprep.subr.mxu0 0.0
      %306 = vmatpush2.msra.mxu0 0.0
      %307 = vmatprep.subr.mxu0 0.0
      %308 = vmatpush2.msra.mxu0 0.0
      %309 = vmatprep.subr.mxu0 0.0
      %310 = vmatpush2.msra.mxu0 0.0
      %311 = vmatprep.subr.mxu0 0.0
      %312 = vmatpush2.msra.mxu0 0.0
      %313 = vmatprep.subr.mxu0 0.0
      %314 = vmatpush2.msra.mxu0 0.0
      %315 = vmatprep.subr.mxu0 0.0
      %316 = vmatpush2.msra.mxu0 0.0
      %317 = vmatprep.subr.mxu0 0.0
      %318 = vmatpush2.msra.mxu0 0.0
      %319 = vmatprep.subr.mxu0 0.0
      %320 = vmatpush2.msra.mxu0 0.0
      %321 = vmatprep.subr.mxu0 0.0
      %322 = vmatpush2.msra.mxu0 0.0
      %323 = vmatprep.subr.mxu0 0.0
      %324 = vmatpush2.msra.mxu0 0.0
      %325 = vmatprep.subr.mxu0 0.0
      %326 = vmatpush2.msra.mxu0 0.0
      %327 = vmatprep.subr.mxu0 0.0
      %328 = vmatpush2.msra.mxu0 0.0
      %329 = vmatprep.subr.mxu0 0.0
      %330 = vmatpush2.msra.mxu0 0.0
      %331 = vmatprep.mubr.f32.mxu0 0.0
      %332 = vmatmul.mubr.f32.gmra.mxu0 %v258
      %v333 = vpop.f32.mrf.mxu0
      %v334 = vadd.f32 0.0, %v333
      %v335 = vpop.f32.mrf.mxu0
      %336 = vmatprep.mubr.f32.mxu0 0.0
      %337 = vmatmul.mubr.f32.gmra.mxu0 %v261
      %v338 = vpop.f32.mrf.mxu0
      %v339 = vadd.f32 0.0, %v338
      %v340 = vpop.f32.mrf.mxu0
      %341 = vdwg.mxu0
      %v342 = vld [vmem:[%s3] sm:$0xff]
      %vm343 = vcmask 64512
      %v345 = vsel %vm343, %v252, 0
      %v348 = vsel %vm343, %v253, 0
      %350 = vmatprep.subr.mxu0 0.0
      %351 = vmatpush1.msra.mxu0 0.0
      %352 = vmatprep.subr.mxu0 0.0
      %353 = vmatpush1.msra.mxu0 0.0
      %354 = vmatprep.subr.mxu0 0.0
      %355 = vmatpush1.msra.mxu0 0.0
      %356 = vmatprep.subr.mxu0 0.0
      %357 = vmatpush1.msra.mxu0 0.0
      %358 = vmatprep.subr.mxu0 0.0
      %359 = vmatpush1.msra.mxu0 0.0
      %360 = vmatprep.subr.mxu0 0.0
      %361 = vmatpush1.msra.mxu0 0.0
      %362 = vmatprep.subr.mxu0 0.0
      %363 = vmatpush1.msra.mxu0 0.0
      %364 = vmatprep.subr.mxu0 0.0
      %365 = vmatpush1.msra.mxu0 0.0
      %366 = vmatprep.subr.mxu0 0.0
      %367 = vmatpush1.msra.mxu0 0.0
      %368 = vmatprep.subr.mxu0 0.0
      %369 = vmatpush1.msra.mxu0 0.0
      %370 = vmatprep.subr.mxu0 0.0
      %371 = vmatpush1.msra.mxu0 0.0
      %372 = vmatprep.subr.mxu0 0.0
      %373 = vmatpush1.msra.mxu0 0.0
      %374 = vmatprep.subr.mxu0 0.0
      %375 = vmatpush1.msra.mxu0 0.0
      %376 = vmatprep.subr.mxu0 0.0
      %377 = vmatpush1.msra.mxu0 0.0
      %378 = vmatprep.subr.mxu0 0.0
      %379 = vmatpush1.msra.mxu0 0.0
      %380 = vmatprep.subr.mxu0 0.0
      %381 = vmatpush1.msra.mxu0 %v342
      %382 = vmatprep.subr.mxu0 0.0
      %383 = vmatpush2.msra.mxu0 0.0
      %384 = vmatprep.subr.mxu0 0.0
      %385 = vmatpush2.msra.mxu0 0.0
      %386 = vmatprep.subr.mxu0 0.0
      %387 = vmatpush2.msra.mxu0 0.0
      %388 = vmatprep.subr.mxu0 0.0
      %389 = vmatpush2.msra.mxu0 0.0
      %390 = vmatprep.subr.mxu0 0.0
      %391 = vmatpush2.msra.mxu0 0.0
      %392 = vmatprep.subr.mxu0 0.0
      %393 = vmatpush2.msra.mxu0 0.0
      %394 = vmatprep.subr.mxu0 0.0
      %395 = vmatpush2.msra.mxu0 0.0
      %396 = vmatprep.subr.mxu0 0.0
      %397 = vmatpush2.msra.mxu0 0.0
      %398 = vmatprep.subr.mxu0 0.0
      %399 = vmatpush2.msra.mxu0 0.0
      %400 = vmatprep.subr.mxu0 0.0
      %401 = vmatpush2.msra.mxu0 0.0
      %402 = vmatprep.subr.mxu0 0.0
      %403 = vmatpush2.msra.mxu0 0.0
      %404 = vmatprep.subr.mxu0 0.0
      %405 = vmatpush2.msra.mxu0 0.0
      %406 = vmatprep.subr.mxu0 0.0
      %407 = vmatpush2.msra.mxu0 0.0
      %408 = vmatprep.subr.mxu0 0.0
      %409 = vmatpush2.msra.mxu0 0.0
      %410 = vmatprep.subr.mxu0 0.0
      %411 = vmatpush2.msra.mxu0 0.0
      %412 = vmatprep.subr.mxu0 0.0
      %413 = vmatpush2.msra.mxu0 0.0
      %414 = vmatprep.mubr.f32.mxu0 0.0
      %415 = vmatmul.mubr.f32.gmra.mxu0 %v345
      %v416 = vpop.f32.mrf.mxu0
      %v417 = vadd.f32 0.0, %v416
      %v418 = vpop.f32.mrf.mxu0
      %419 = vmatprep.mubr.f32.mxu0 0.0
      %420 = vmatmul.mubr.f32.gmra.mxu0 %v348
      %v421 = vpop.f32.mrf.mxu0
      %v422 = vadd.f32 0.0, %v421
      %v423 = vpop.f32.mrf.mxu0
      %424 = vdwg.mxu0
      %v425 = vmul.f32 %v334, %v417
      %v426 = vmul.f32 %v339, %v422
      %v427 = vld [vmem:[%s4] sm:$0xff]
      %v428 = vld [vmem:[%s4 + $0x8] sm:$0xff]
      %v429 = vld [vmem:[%s4 + $0x10] sm:$0xff]
      %v430 = vld [vmem:[%s4 + $0x18] sm:$0xff]
      %v431 = vld [vmem:[%s4 + $0x20] sm:$0xff]
      %v432 = vld [vmem:[%s4 + $0x28] sm:$0xff]
      %v433 = vld [vmem:[%s4 + $0x30] sm:$0xff]
      %v434 = vld [vmem:[%s4 + $0x38] sm:$0xff]
      %v435 = vld [vmem:[%s4 + $0x40] sm:$0xff]
      %v436 = vld [vmem:[%s4 + $0x48] sm:$0xff]
      %vm437 = vcmask 654336
      %v439 = vsel %vm437, %v425, 0
      %v442 = vsel %vm437, %v426, 0
      %444 = vmatprep.subr.mxu0 0.0
      %445 = vmatpush1.msra.mxu0 0.0
      %446 = vmatprep.subr.mxu0 0.0
      %447 = vmatpush1.msra.mxu0 0.0
      %448 = vmatprep.subr.mxu0 0.0
      %449 = vmatpush1.msra.mxu0 0.0
      %450 = vmatprep.subr.mxu0 0.0
      %451 = vmatpush1.msra.mxu0 0.0
      %452 = vmatprep.subr.mxu0 0.0
      %453 = vmatpush1.msra.mxu0 0.0
      %454 = vmatprep.subr.mxu0 0.0
      %455 = vmatpush1.msra.mxu0 0.0
      %456 = vmatprep.subr.mxu0 0.0
      %457 = vmatpush1.msra.mxu0 %v436
      %458 = vmatprep.subr.mxu0 0.0
      %459 = vmatpush1.msra.mxu0 %v435
      %460 = vmatprep.subr.mxu0 0.0
      %461 = vmatpush1.msra.mxu0 %v434
      %462 = vmatprep.subr.mxu0 0.0
      %463 = vmatpush1.msra.mxu0 %v433
      %464 = vmatprep.subr.mxu0 0.0
      %465 = vmatpush1.msra.mxu0 %v432
      %466 = vmatprep.subr.mxu0 0.0
      %467 = vmatpush1.msra.mxu0 %v431
      %468 = vmatprep.subr.mxu0 0.0
      %469 = vmatpush1.msra.mxu0 %v430
      %470 = vmatprep.subr.mxu0 0.0
      %471 = vmatpush1.msra.mxu0 %v429
      %472 = vmatprep.subr.mxu0 0.0
      %473 = vmatpush1.msra.mxu0 %v428
      %474 = vmatprep.subr.mxu0 0.0
      %475 = vmatpush1.msra.mxu0 %v427
      %476 = vmatprep.subr.mxu0 0.0
      %477 = vmatpush2.msra.mxu0 0.0
      %478 = vmatprep.subr.mxu0 0.0
      %479 = vmatpush2.msra.mxu0 0.0
      %480 = vmatprep.subr.mxu0 0.0
      %481 = vmatpush2.msra.mxu0 0.0
      %482 = vmatprep.subr.mxu0 0.0
      %483 = vmatpush2.msra.mxu0 0.0
      %484 = vmatprep.subr.mxu0 0.0
      %485 = vmatpush2.msra.mxu0 0.0
      %486 = vmatprep.subr.mxu0 0.0
      %487 = vmatpush2.msra.mxu0 0.0
      %488 = vmatprep.subr.mxu0 0.0
      %489 = vmatpush2.msra.mxu0 0.0
      %490 = vmatprep.subr.mxu0 0.0
      %491 = vmatpush2.msra.mxu0 0.0
      %492 = vmatprep.subr.mxu0 0.0
      %493 = vmatpush2.msra.mxu0 0.0
      %494 = vmatprep.subr.mxu0 0.0
      %495 = vmatpush2.msra.mxu0 0.0
      %496 = vmatprep.subr.mxu0 0.0
      %497 = vmatpush2.msra.mxu0 0.0
      %498 = vmatprep.subr.mxu0 0.0
      %499 = vmatpush2.msra.mxu0 0.0
      %500 = vmatprep.subr.mxu0 0.0
      %501 = vmatpush2.msra.mxu0 0.0
      %502 = vmatprep.subr.mxu0 0.0
      %503 = vmatpush2.msra.mxu0 0.0
      %504 = vmatprep.subr.mxu0 0.0
      %505 = vmatpush2.msra.mxu0 0.0
      %506 = vmatprep.subr.mxu0 0.0
      %507 = vmatpush2.msra.mxu0 0.0
      %508 = vmatprep.mubr.f32.mxu0 0.0
      %509 = vmatmul.mubr.f32.gmra.mxu0 %v439
      %v510 = vpop.f32.mrf.mxu0
      %v511 = vadd.f32 0.0, %v510
      %v512 = vpop.f32.mrf.mxu0
      %513 = vmatprep.mubr.f32.mxu0 0.0
      %514 = vmatmul.mubr.f32.gmra.mxu0 %v442
      %v515 = vpop.f32.mrf.mxu0
      %v516 = vadd.f32 0.0, %v515
      %v517 = vpop.f32.mrf.mxu0
      %518 = vdwg.mxu0
      %vm519 = vcmask 130048
      %520 = vst.msk [vmem:[%s248] sm:$0xff] %vm519, %v511
      %521 = vst.msk [vmem:[%s248 + $0x8] sm:$0xff] %vm519, %v516
      %s522 = smul.u32 2, %s16
      %p523 = scmp.lt.s32.totalorder %s522, 3
      %s524 = scalar_select %p523, %s522, 3
      %s525 = smul.addr %s524, 8
      %s526 = scalar_lea.vmem %s5, %s525
      // Predicated region
      $region41: #{tpu_custom_call.1} parent=39 // pred_check
        %p527 = pneg %p149
      $region42: #{tpu_custom_call.1} parent=39 // pred_check_branch
        %529 = sbr.rel (%p527) target = $region44
      $region43: #{tpu_custom_call.1} parent=39 // pred_region
        %s530 = smul.u32 2, %s16
      $region44: #{tpu_custom_call.1} parent=39 // pred_fallthru
        _
    $region40: #{tpu_custom_call.1} parent=5 // pred_fallthru
      _
    %p531 = scmp.le.s32.totalorder 2, %s11
    // Predicated region
    $region45: #{tpu_custom_call.1} parent=5 // pred_check
      %p532 = pneg %p531
    $region46: #{tpu_custom_call.1} parent=5 // pred_check_branch
      %534 = sbr.rel (%p532) target = $region48
    $region47: #{tpu_custom_call.1} parent=5 // pred_region
      %s535 = ssub.s32 %s11, 2
      // Predicated region
      $region49: #{tpu_custom_call.1} parent=47 // pred_check
        %p536 = pneg %p155
      $region50: #{tpu_custom_call.1} parent=47 // pred_check_branch
        %538 = sbr.rel (%p536) target = $region52
      $region51: #{tpu_custom_call.1} parent=47 // pred_region
        %s539 = smul.u32 2, %s17
        %p540 = scmp.lt.s32.totalorder %s539, 3
        %s541 = scalar_select %p540, %s539, 3
        %s542 = smul.addr %s541, 8
        %s543 = scalar_lea.vmem %s5, %s542
      $region52: #{tpu_custom_call.1} parent=47 // pred_fallthru
        _
    $region48: #{tpu_custom_call.1} parent=5 // pred_fallthru
      _
  $region6: #{tpu_custom_call.1} parent=0 // loop_footer
    %s15 = sadd.s32 1, %s11
  $region7: #{tpu_custom_call.1} parent=0 // loop_footer_branch
    %10 = sbr.rel target = $region3
  $region8: #{tpu_custom_call.1} parent=0 // loop_exit
    _

</llo_original>
